<compile_context>
chip_gen: v7x
topology: tpu7x:2x2x1
jax: 0.10.0
libtpu: 0.0.40
codegen_flags: <defaults>
</compile_context>

<pallas_src>
import math

import numpy as np
import jax
import jax.numpy as jnp
from jax import lax
from jax.experimental import pallas as pl
from jax.experimental.pallas import tpu as pltpu


def _bilinear_matrix(n_in: int, n_out: int) -> np.ndarray:
    """(n_out, n_in) 1-D bilinear interpolation matrix (PyTorch align_corners=False)."""
    scale = n_in / n_out
    i = np.arange(n_out, dtype=np.float64)
    src = np.maximum((i + 0.5) * scale - 0.5, 0.0)      # clamp negative coords (PyTorch)
    i0 = np.minimum(np.floor(src).astype(np.int64), n_in - 1)
    i1 = np.minimum(i0 + 1, n_in - 1)
    frac = src - i0
    m = np.zeros((n_out, n_in), dtype=np.float32)
    m[np.arange(n_out), i0] += (1.0 - frac).astype(np.float32)
    m[np.arange(n_out), i1] += frac.astype(np.float32)
    return m


def _make_upsample_kernel(H: int):
    """Kernel over a flat (block_bc*H, W) input tile -> (block_bc*H, 4W) output tile."""

    def kernel(x_ref, awt_ref, o_ref):
        x = x_ref[...]                                   # (rows, W), native dtype
        awt = awt_ref[...]                               # (W, 2W), same dtype (exact weights)
        rows = x.shape[0]

        # --- W direction: one flat MXU matmul, f32 accumulation (default precision). ---
        t = jnp.dot(x, awt, preferred_element_type=jnp.float32)   # (rows, 2W) f32

        # --- H direction: exact 2x lerp on the VPU using sublane-shifted rows. ---
        # Output row 2h   = 0.25*t[h-1] + 0.75*t[h]   (t[0]   at h==0)
        # Output row 2h+1 = 0.75*t[h]   + 0.25*t[h+1] (t[H-1] at h==H-1)
        if H == 1:
            y_even = t
            y_odd = t
        else:
            t_up = jnp.concatenate([t[:1], t[:-1]], axis=0)    # row h-1 (edge-clamped)
            t_dn = jnp.concatenate([t[1:], t[-1:]], axis=0)    # row h+1 (edge-clamped)
            h = lax.broadcasted_iota(jnp.int32, (rows, 1), 0) % H
            y_even = jnp.where(h == 0, t, 0.75 * t + 0.25 * t_up)
            y_odd = jnp.where(h == H - 1, t, 0.75 * t + 0.25 * t_dn)

        # Rows (2h, 2h+1) are contiguous in the final layout, so a lane concat
        # yields a lane-dense (rows, 4W) slab bit-identical to (2H, 2W) order.
        y = jnp.concatenate([y_even, y_odd], axis=-1)            # (rows, 4W) f32
        o_ref[...] = y.astype(o_ref.dtype)

    return kernel


def _pick_block_bc(BC: int, max_bc: int, align: int):
    """Largest block that divides BC (no pad/slice HBM copies), keeps block rows a
    multiple of 8 sublanes, and fits the VMEM budget.  Prefers >=2 grid steps
    (DMA pipelining / 2-TC split on v7x) and an even step count (v7x balance).
    Returns (block_bc, needs_padding)."""
    divisors = [d for d in range(1, BC + 1) if BC % d == 0]
    valid = [d for d in divisors if d <= max_bc and (d % align == 0 or d == BC)]
    if valid:
        multi = [d for d in valid if BC // d >= 2]
        even = [d for d in multi if (BC // d) % 2 == 0]
        pool = even or multi or valid
        return max(pool), False
    # Fallback: no aligned divisor fits the budget -> pad the BC axis.
    blk = max(align, (max_bc // align) * align)
    return blk, True


def upsample2x_bilinear(x, *, block_bc=None, vmem_budget_bytes=32 * 1024 * 1024):
    """x: (B, C, H, W) -> (B, C, 2H, 2W), bilinear, align_corners=False."""
    B, C, H, W = x.shape
    Ho, Wo = 2 * H, 2 * W
    BC = B * C
    itemsize = jnp.dtype(x.dtype).itemsize

    # VMEM model per bc-image: double-buffered in/out tiles + in-kernel f32 temps
    # (t, two shifted copies, even/odd lerps, lane-concat result ~ 16 f32 per input elem).
    io_bytes_per_bc = (2 * H * W + 2 * H * 2 * Wo) * itemsize
    interm_bytes_per_bc = 16 * H * W * 4
    per_bc = io_bytes_per_bc + interm_bytes_per_bc
    max_bc = max(1, vmem_budget_bytes // per_bc)
    align = 8 // math.gcd(H, 8)         # block rows (block_bc * H) must be a multiple of 8

    if block_bc is None:
        block_bc, needs_pad = _pick_block_bc(BC, max_bc, align)
    else:
        needs_pad = (BC % block_bc) != 0

    BC_pad = ((BC + block_bc - 1) // block_bc) * block_bc
    n_blocks = BC_pad // block_bc
    block_rows = block_bc * H

    x2d = x.reshape(BC * H, W)          # free: pure row-major relabel
    if BC_pad != BC:
        # TODO(synk): only reached when no aligned divisor of B*C fits the VMEM
        # budget; costs one extra pad + slice pass over HBM.
        x2d = jnp.pad(x2d, ((0, (BC_pad - BC) * H), (0, 0)))

    # (W, 2W) interpolation matrix; weights {0, 0.25, 0.75, 1} are exact in bf16.
    awt = jnp.asarray(_bilinear_matrix(W, Wo).T, dtype=x.dtype)

    out2d = pl.pallas_call(
        _make_upsample_kernel(H),
        out_shape=jax.ShapeDtypeStruct((BC_pad * H, 2 * Wo), x.dtype),
        grid_spec=pltpu.PrefetchScalarGridSpec(
            num_scalar_prefetch=0,
            grid=(n_blocks,),
            in_specs=[
                pl.BlockSpec((block_rows, W), lambda i: (i, 0)),   # input tile
                pl.BlockSpec((W, Wo), lambda i: (0, 0)),           # resident constant
            ],
            out_specs=pl.BlockSpec((block_rows, 2 * Wo), lambda i: (i, 0)),
        ),
        compiler_params=pltpu.CompilerParams(
            dimension_semantics=("parallel",),
            vmem_limit_bytes=48 * 1024 * 1024,   # > defaults, < v7x's 64 MiB physical
        ),
    )(x2d, awt)

    if BC_pad != BC:
        out2d = out2d[: BC * H]
    # (BC*H, 4W) has exactly the flat element order of (B, C, 2H, 2W) -> free reshape.
    return out2d.reshape(B, C, Ho, Wo)


def upsample2x_bilinear_ref(x):
    """Pure-JAX reference mirroring F.interpolate(mode='bilinear', align_corners=False)."""
    B, C, H, W = x.shape

    def src_idx(n_in, n_out):
        i = jnp.arange(n_out, dtype=jnp.float32)
        src = jnp.maximum((i + 0.5) * (n_in / n_out) - 0.5, 0.0)
        i0 = jnp.minimum(jnp.floor(src).astype(jnp.int32), n_in - 1)
        i1 = jnp.minimum(i0 + 1, n_in - 1)
        frac = src - i0.astype(jnp.float32)
        return i0, i1, frac

    h0, h1, fh = src_idx(H, 2 * H)
    w0, w1, fw = src_idx(W, 2 * W)
    xf = x.astype(jnp.float32)
    xh = (xf[:, :, h0, :] * (1.0 - fh)[None, None, :, None]
          + xf[:, :, h1, :] * fh[None, None, :, None])
    y = xh[:, :, :, w0] * (1.0 - fw) + xh[:, :, :, w1] * fw
    return y.astype(x.dtype)


if __name__ == "__main__":
    key = jax.random.PRNGKey(0)
    B, C, H, W = 2, 4, 16, 16
    x = jax.random.normal(key, (B, C, H, W), dtype=jnp.float32)

    out = jax.block_until_ready(upsample2x_bilinear(x))
    ref = upsample2x_bilinear_ref(x)
    assert out.shape == (B, C, 2 * H, 2 * W) and out.dtype == x.dtype
    # Tolerance covers a possible single-pass bf16 MXU path for the W-direction
    # matmul under default precision; the H direction is exact f32 VPU math.
    assert jnp.allclose(out, ref, atol=1e-2, rtol=1e-2), float(jnp.max(jnp.abs(out - ref)))

    # Second shape: non-power-of-two channel count exercises the divisor / grid choice.
    x2 = jax.random.normal(jax.random.PRNGKey(1), (1, 3, 8, 8), dtype=jnp.float32)
    out2 = jax.block_until_ready(upsample2x_bilinear(x2))
    ref2 = upsample2x_bilinear_ref(x2)
    assert out2.shape == (1, 3, 16, 16)
    assert jnp.allclose(out2, ref2, atol=1e-2, rtol=1e-2), float(jnp.max(jnp.abs(out2 - ref2)))

    print("KERNEL_OK")
</pallas_src>

<mosaic_0001>
module attributes {stable_mosaic.version = 11 : i64} {
  func.func @kernel(%arg0: i32, %arg1: memref<64x16xf32, #tpu.memory_space<vmem>>, %arg2: memref<16x32xf32, #tpu.memory_space<vmem>>, %arg3: memref<64x64xf32, #tpu.memory_space<vmem>>) attributes {dimension_semantics = [#tpu.dimension_semantics<parallel>], iteration_bounds = array<i64: 2>, scalar_prefetch = 0 : i64, scratch_operands = 0 : i64, tpu.core_type = #tpu.core_type<tc>, window_params = [{transform_indices = @transform_0, window_bounds = array<i64: 64, 16>}, {pipeline_mode = #tpu.pipeline_mode<synchronous>, transform_indices = @transform_1, window_bounds = array<i64: 16, 32>}, {transform_indices = @transform_2, window_bounds = array<i64: 64, 64>}]} {
    %c0 = arith.constant 0 : index
    %c0_0 = arith.constant 0 : index
    %0 = vector.load %arg1[%c0, %c0_0] : memref<64x16xf32, #tpu.memory_space<vmem>>, vector<64x16xf32>
    %c0_1 = arith.constant 0 : index
    %c0_2 = arith.constant 0 : index
    %1 = vector.load %arg2[%c0_1, %c0_2] : memref<16x32xf32, #tpu.memory_space<vmem>>, vector<16x32xf32>
    %cst = arith.constant dense<0.000000e+00> : vector<64x32xf32>
    %2 = tpu.matmul %0, %1, %cst {dimension_numbers = #tpu.dot_dimension_numbers<[1], [0], [0], [1], [0, 0, 1, 1], [], []>} : vector<64x16xf32>, vector<16x32xf32>, vector<64x32xf32> -> vector<64x32xf32>
    %3 = vector.extract_strided_slice %2 {offsets = [0, 0], sizes = [1, 32], strides = [1, 1]} : vector<64x32xf32> to vector<1x32xf32>
    %4 = vector.extract_strided_slice %2 {offsets = [0, 0], sizes = [63, 32], strides = [1, 1]} : vector<64x32xf32> to vector<63x32xf32>
    %5 = tpu.concatenate %3, %4 in 0 : vector<1x32xf32>, vector<63x32xf32> -> vector<64x32xf32>
    %6 = vector.extract_strided_slice %2 {offsets = [1, 0], sizes = [63, 32], strides = [1, 1]} : vector<64x32xf32> to vector<63x32xf32>
    %7 = vector.extract_strided_slice %2 {offsets = [63, 0], sizes = [1, 32], strides = [1, 1]} : vector<64x32xf32> to vector<1x32xf32>
    %8 = tpu.concatenate %6, %7 in 0 : vector<63x32xf32>, vector<1x32xf32> -> vector<64x32xf32>
    %9 = tpu.iota {dimensions = array<i32: 0>} : vector<64x1xi32>
    %c16_i32 = arith.constant 16 : i32
    %c0_i32 = arith.constant 0 : i32
    %10 = arith.cmpi eq, %c16_i32, %c0_i32 : i32
    %c1_i32 = arith.constant 1 : i32
    %11 = arith.select %10, %c1_i32, %c16_i32 : i32
    %12 = vector.broadcast %11 : i32 to vector<64x1xi32>
    %13 = arith.remsi %9, %12 : vector<64x1xi32>
    %c0_i32_3 = arith.constant 0 : i32
    %14 = vector.broadcast %c0_i32_3 : i32 to vector<64x1xi32>
    %15 = arith.cmpi ne, %13, %14 : vector<64x1xi32>
    %c0_i32_4 = arith.constant 0 : i32
    %16 = vector.broadcast %c0_i32_4 : i32 to vector<64x1xi32>
    %17 = arith.cmpi slt, %13, %16 : vector<64x1xi32>
    %c0_i32_5 = arith.constant 0 : i32
    %18 = arith.cmpi slt, %11, %c0_i32_5 : i32
    %19 = vector.broadcast %18 : i1 to vector<64x1xi1>
    %20 = vector.broadcast %19 : vector<64x1xi1> to vector<64x1xi1>
    %21 = arith.xori %17, %20 : vector<64x1xi1>
    %22 = arith.andi %21, %15 : vector<64x1xi1>
    %23 = vector.broadcast %11 : i32 to vector<64x1xi32>
    %24 = arith.addi %13, %23 : vector<64x1xi32>
    %25 = arith.select %22, %24, %13 : vector<64x1xi1>, vector<64x1xi32>
    %c0_i32_6 = arith.constant 0 : i32
    %26 = vector.broadcast %c0_i32_6 : i32 to vector<64x1xi32>
    %27 = arith.cmpi eq, %25, %26 : vector<64x1xi32>
    %cst_7 = arith.constant 7.500000e-01 : f32
    %28 = vector.broadcast %cst_7 : f32 to vector<64x32xf32>
    %29 = arith.mulf %28, %2 : vector<64x32xf32>
    %cst_8 = arith.constant 2.500000e-01 : f32
    %30 = vector.broadcast %cst_8 : f32 to vector<64x32xf32>
    %31 = arith.mulf %30, %5 : vector<64x32xf32>
    %32 = arith.addf %29, %31 : vector<64x32xf32>
    %33 = vector.shape_cast %27 : vector<64x1xi1> to vector<64x1xi1>
    %34 = vector.broadcast %33 : vector<64x1xi1> to vector<64x32xi1>
    %35 = arith.select %34, %2, %32 : vector<64x32xi1>, vector<64x32xf32>
    %c15_i32 = arith.constant 15 : i32
    %36 = vector.broadcast %c15_i32 : i32 to vector<64x1xi32>
    %37 = arith.cmpi eq, %25, %36 : vector<64x1xi32>
    %cst_9 = arith.constant 7.500000e-01 : f32
    %38 = vector.broadcast %cst_9 : f32 to vector<64x32xf32>
    %39 = arith.mulf %38, %2 : vector<64x32xf32>
    %cst_10 = arith.constant 2.500000e-01 : f32
    %40 = vector.broadcast %cst_10 : f32 to vector<64x32xf32>
    %41 = arith.mulf %40, %8 : vector<64x32xf32>
    %42 = arith.addf %39, %41 : vector<64x32xf32>
    %43 = vector.shape_cast %37 : vector<64x1xi1> to vector<64x1xi1>
    %44 = vector.broadcast %43 : vector<64x1xi1> to vector<64x32xi1>
    %45 = arith.select %44, %2, %42 : vector<64x32xi1>, vector<64x32xf32>
    %46 = tpu.concatenate %35, %45 in 1 : vector<64x32xf32>, vector<64x32xf32> -> vector<64x64xf32>
    %c0_11 = arith.constant 0 : index
    %c0_12 = arith.constant 0 : index
    %47 = vector.load %arg3[%c0_11, %c0_12] : memref<64x64xf32, #tpu.memory_space<vmem>>, vector<64x64xf32>
    tpu.vector_store %arg3[%c0_11, %c0_12], %46 {strides = array<i32>} : memref<64x64xf32, #tpu.memory_space<vmem>>, vector<64x64xf32>,
    return
  }
  func.func @transform_0(%arg0: i32) -> (i32, i32) {
    %c0_i32 = arith.constant 0 : i32
    %c0_i32_0 = arith.constant 0 : i32
    return %arg0, %c0_i32 : i32, i32
  }
  func.func @transform_1(%arg0: i32) -> (i32, i32) {
    %c0_i32 = arith.constant 0 : i32
    %c0_i32_0 = arith.constant 0 : i32
    %c0_i32_1 = arith.constant 0 : i32
    return %c0_i32, %c0_i32_0 : i32, i32
  }
  func.func @transform_2(%arg0: i32) -> (i32, i32) {
    %c0_i32 = arith.constant 0 : i32
    %c0_i32_0 = arith.constant 0 : i32
    return %arg0, %c0_i32 : i32, i32
  }
}

</mosaic_0001>

<llo_original>
// kernel: tpu_custom_call.1
$region0: #{tpu_custom_call.1}
  #allocation0 [shape = 'u32[]', space=smem, size = 0x4, offset = 0x4, fixed_abs, tag = 'smem constant byte address 0x4 - core index']
  #allocation1 [shape = 'u32[144,128]{1,0:T(1,128)}', space=vmem, size = 0x12000, scoped, tag = 'internal scratch']
  %s0 = inlined_call_operand.vmem [shape: f32[128,16], index: 0, kind: input, shape index: {}]
  %s1 = inlined_call_operand.vmem [shape: f32[16,32], index: 1, kind: input, shape index: {}]
  %s2 = inlined_call_operand.vmem [shape: f32[128,64], index: 2, kind: output, shape index: {}]
  %s3 = sld [smem:[#allocation0]]
  $region41: #{tpu_custom_call.1} parent=0
    _
  %s5 = ssub.s32 1, %s3
  %s6 = scalar_select 0, %s5, %s3
  loop: start=0, step=1, limit=4
  $region2: #{tpu_custom_call.1} parent=0 // loop_pre_header
    _
  $region3: #{tpu_custom_call.1} parent=0 // loop_header
    %s8 = sphi 0, %s12
    %p9 = scmp.ge.s32.totalorder %s8, 4
    %s18 = sphi 0, %s20
    %s21 = sphi 0, %s18
    %s22 = sphi 0, %s21
    %s38 = sphi 0, %s22
    %s42 = sphi 0, %s42
    %s44 = sphi 0, %s42
    %s45 = sphi 0, %s44
    %s59 = sphi 0, %s45
    %s65 = sphi 0, %s67
    %s68 = sphi 0, %s65
    %s69 = sphi 0, %s68
    %s85 = sphi 0, %s69
  $region4: #{tpu_custom_call.1} parent=0 // loop_header_branch
    %11 = sbr.rel (%p9) target = $region8
  $region5: #{tpu_custom_call.1} parent=0 // loop_body
    %s13 = ssub.s32 %s8, 1
    %s14 = ssub.s32 %s8, 2
    %s15 = sadd.s32 %s8, 1
    %s16 = ssub.s32 %s8, %s15
    %p17 = scmp.eq.s32.totalorder %s16, 0
    %s19 = sadd.s32 %s18, 1
    %s20 = scalar_select %p17, %s18, %s19
    %p23 = pneg %p17
    %p24 = scmp.eq.s32.totalorder %s8, 1
    %p25 = por %p23, %p24
    %p26 = scmp.ne.s32.totalorder %s18, %s21
    %p27 = scmp.eq.s32.totalorder %s8, 0
    %p28 = por %p26, %p27
    %p29 = scmp.ne.s32.totalorder %s18, %s21
    %p30 = scmp.eq.s32.totalorder %s13, 1
    %p31 = por %p29, %p30
    %p32 = scmp.ne.s32.totalorder %s21, %s22
    %p33 = scmp.eq.s32.totalorder %s13, 0
    %p34 = por %p32, %p33
    %p35 = scmp.ne.s32.totalorder %s21, %s22
    %p36 = scmp.eq.s32.totalorder %s14, 1
    %p37 = por %p35, %p36
    %p39 = scmp.ne.s32.totalorder %s22, %s38
    %p40 = scmp.eq.s32.totalorder %s14, 0
    %p41 = por %p39, %p40
    %s43 = sadd.s32 %s42, 1
    %p46 = scmp.eq.s32.totalorder %s8, 1
    %p47 = scmp.ne.s32.totalorder %s42, %s44
    %p48 = scmp.eq.s32.totalorder %s8, 0
    %p49 = por %p47, %p48
    %p50 = scmp.ne.s32.totalorder %s42, %s44
    %p51 = scmp.eq.s32.totalorder %s13, 1
    %p52 = por %p50, %p51
    %p53 = scmp.ne.s32.totalorder %s44, %s45
    %p54 = scmp.eq.s32.totalorder %s13, 0
    %p55 = por %p53, %p54
    %p56 = scmp.ne.s32.totalorder %s44, %s45
    %p57 = scmp.eq.s32.totalorder %s14, 1
    %p58 = por %p56, %p57
    %p60 = scmp.ne.s32.totalorder %s45, %s59
    %p61 = scmp.eq.s32.totalorder %s14, 0
    %p62 = por %p60, %p61
    %s63 = ssub.s32 %s8, %s15
    %p64 = scmp.eq.s32.totalorder %s63, 0
    %s66 = sadd.s32 %s65, 1
    %s67 = scalar_select %p64, %s65, %s66
    %p70 = pneg %p64
    %p71 = scmp.eq.s32.totalorder %s8, 1
    %p72 = por %p70, %p71
    %p73 = scmp.ne.s32.totalorder %s65, %s68
    %p74 = scmp.eq.s32.totalorder %s8, 0
    %p75 = por %p73, %p74
    %p76 = scmp.ne.s32.totalorder %s65, %s68
    %p77 = scmp.eq.s32.totalorder %s13, 1
    %p78 = por %p76, %p77
    %p79 = scmp.ne.s32.totalorder %s68, %s69
    %p80 = scmp.eq.s32.totalorder %s13, 0
    %p81 = por %p79, %p80
    %p82 = scmp.ne.s32.totalorder %s68, %s69
    %p83 = scmp.eq.s32.totalorder %s14, 1
    %p84 = por %p82, %p83
    %p86 = scmp.ne.s32.totalorder %s69, %s85
    %p87 = scmp.eq.s32.totalorder %s14, 0
    %p88 = por %p86, %p87
    %p89 = scmp.le.s32.totalorder 1, %s8
    %p90 = scmp.lt.s32.totalorder %s8, 3
    %p91 = pnand %p89, %p90
    %p92 = pneg %p91
    // Predicated region
    $region9: #{tpu_custom_call.1} parent=5 // pred_check
      _
    $region10: #{tpu_custom_call.1} parent=5 // pred_check_branch
      %94 = sbr.rel (%p91) target = $region12
    $region11: #{tpu_custom_call.1} parent=5 // pred_region
      %s95 = ssub.s32 %s8, 1
      // Predicated region
      $region13: #{tpu_custom_call.1} parent=11 // pred_check
        %p96 = pneg %p55
      $region14: #{tpu_custom_call.1} parent=11 // pred_check_branch
        %98 = sbr.rel (%p96) target = $region16
      $region15: #{tpu_custom_call.1} parent=11 // pred_region
        _
      $region16: #{tpu_custom_call.1} parent=11 // pred_fallthru
        _
    $region12: #{tpu_custom_call.1} parent=5 // pred_fallthru
      _
    %p99 = scmp.lt.s32.totalorder %s8, 2
    // Predicated region
    $region17: #{tpu_custom_call.1} parent=5 // pred_check
      %p100 = pneg %p99
    $region18: #{tpu_custom_call.1} parent=5 // pred_check_branch
      %102 = sbr.rel (%p100) target = $region20
    $region19: #{tpu_custom_call.1} parent=5 // pred_region
      // Predicated region
      $region21: #{tpu_custom_call.1} parent=19 // pred_check
        %p103 = pneg %p28
      $region22: #{tpu_custom_call.1} parent=19 // pred_check_branch
        %105 = sbr.rel (%p103) target = $region24
      $region23: #{tpu_custom_call.1} parent=19 // pred_region
        %s106 = smul.u32 8, %s8
        %p107 = scmp.lt.s32.totalorder %s106, 15
        %s108 = scalar_select %p107, %s106, 15
        %s109 = smul.addr %s108, 8
        %s110 = scalar_lea.vmem %s0, %s109
        %s111 = smul.u32 8, %s8
      $region24: #{tpu_custom_call.1} parent=19 // pred_fallthru
        _
    $region20: #{tpu_custom_call.1} parent=5 // pred_fallthru
      _
    %p112 = scmp.le.s32.totalorder 1, %s8
    %p113 = scmp.lt.s32.totalorder %s8, 3
    %p114 = pnand %p112, %p113
    %p115 = pneg %p114
    // Predicated region
    $region25: #{tpu_custom_call.1} parent=5 // pred_check
      _
    $region26: #{tpu_custom_call.1} parent=5 // pred_check_branch
      %117 = sbr.rel (%p114) target = $region28
    $region27: #{tpu_custom_call.1} parent=5 // pred_region
      %s118 = ssub.s32 %s8, 1
      %s119 = smul.u32 8, %s13
      %p120 = scmp.lt.s32.totalorder %s119, 15
      %s121 = scalar_select %p120, %s119, 15
      %s122 = smul.addr %s121, 8
      %s123 = scalar_lea.vmem %s0, %s122
      %p124 = pneg %p34
      %p125 = pneg %p31
      %p126 = pneg %p55
      %p127 = pneg %p52
      %p128 = pneg %p81
      %p129 = pneg %p78
      %s130 = smul.u32 8, %s13
      %p131 = scmp.lt.s32.totalorder %s130, 15
      %s132 = scalar_select %p131, %s130, 15
      %s133 = smul.addr %s132, 8
      %s134 = scalar_lea.vmem %s2, %s133
      %s135 = smul.u32 8, %s13
      %p136 = scmp.lt.s32.totalorder %s135, 15
      %s137 = scalar_select %p136, %s135, 15
      %s138 = smul.addr %s137, 8
      %s139 = scalar_lea.vmem %s0, %s138
      %s140 = smul.u32 8, %s13
      %s141 = smul.u32 8, %s13
      %p142 = scmp.lt.s32.totalorder %s141, 15
      %s143 = scalar_select %p142, %s141, 15
      %s144 = smul.addr %s143, 8
      %s145 = scalar_lea.vmem %s2, %s144
      %s146 = smul.u32 8, %s13
      %v147 = vld [vmem:[%s139] sm:$0xff]
      %v148 = vld [vmem:[%s139 + $0x8] sm:$0xff]
      %v149 = vld [vmem:[%s139 + $0x10] sm:$0xff]
      %v150 = vld [vmem:[%s139 + $0x18] sm:$0xff]
      %v151 = vld [vmem:[%s139 + $0x20] sm:$0xff]
      %v152 = vld [vmem:[%s139 + $0x28] sm:$0xff]
      %v153 = vld [vmem:[%s139 + $0x30] sm:$0xff]
      %v154 = vld [vmem:[%s139 + $0x38] sm:$0xff]
      %v155 = vld [vmem:[%s1] sm:$0xff]
      %v156 = vld [vmem:[%s1 + $0x8] sm:$0xff]
      %vm157 = vcmask 130048
      %v159 = vsel %vm157, %v147, 0
      %v162 = vsel %vm157, %v148, 0
      %v165 = vsel %vm157, %v149, 0
      %v168 = vsel %vm157, %v150, 0
      %v171 = vsel %vm157, %v151, 0
      %v174 = vsel %vm157, %v152, 0
      %v177 = vsel %vm157, %v153, 0
      %v180 = vsel %vm157, %v154, 0
      %182 = vmatprep.subr.mxu0 0.0
      %183 = vmatpush1.msra.mxu0 %v155
      %184 = vmatprep.subr.mxu0 0.0
      %185 = vmatpush1.msra.mxu0 %v156
      %186 = vmatprep.subr.mxu0 0.0
      %187 = vmatpush1.msra.mxu0 0.0
      %188 = vmatprep.subr.mxu0 0.0
      %189 = vmatpush1.msra.mxu0 0.0
      %190 = vmatprep.subr.mxu0 0.0
      %191 = vmatpush1.msra.mxu0 0.0
      %192 = vmatprep.subr.mxu0 0.0
      %193 = vmatpush1.msra.mxu0 0.0
      %194 = vmatprep.subr.mxu0 0.0
      %195 = vmatpush1.msra.mxu0 0.0
      %196 = vmatprep.subr.mxu0 0.0
      %197 = vmatpush1.msra.mxu0 0.0
      %198 = vmatprep.subr.mxu0 0.0
      %199 = vmatpush1.msra.mxu0 0.0
      %200 = vmatprep.subr.mxu0 0.0
      %201 = vmatpush1.msra.mxu0 0.0
      %202 = vmatprep.subr.mxu0 0.0
      %203 = vmatpush1.msra.mxu0 0.0
      %204 = vmatprep.subr.mxu0 0.0
      %205 = vmatpush1.msra.mxu0 0.0
      %206 = vmatprep.subr.mxu0 0.0
      %207 = vmatpush1.msra.mxu0 0.0
      %208 = vmatprep.subr.mxu0 0.0
      %209 = vmatpush1.msra.mxu0 0.0
      %210 = vmatprep.subr.mxu0 0.0
      %211 = vmatpush1.msra.mxu0 0.0
      %212 = vmatprep.subr.mxu0 0.0
      %213 = vmatpush1.msra.mxu0 0.0
      %214 = vmatprep.subr.mxu0 0.0
      %215 = vmatpush1.msra.mxu0 0.0
      %216 = vmatprep.subr.mxu0 0.0
      %217 = vmatpush1.msra.mxu0 0.0
      %218 = vmatprep.subr.mxu0 0.0
      %219 = vmatpush1.msra.mxu0 0.0
      %220 = vmatprep.subr.mxu0 0.0
      %221 = vmatpush1.msra.mxu0 0.0
      %222 = vmatprep.subr.mxu0 0.0
      %223 = vmatpush1.msra.mxu0 0.0
      %224 = vmatprep.subr.mxu0 0.0
      %225 = vmatpush1.msra.mxu0 0.0
      %226 = vmatprep.subr.mxu0 0.0
      %227 = vmatpush1.msra.mxu0 0.0
      %228 = vmatprep.subr.mxu0 0.0
      %229 = vmatpush1.msra.mxu0 0.0
      %230 = vmatprep.subr.mxu0 0.0
      %231 = vmatpush1.msra.mxu0 0.0
      %232 = vmatprep.subr.mxu0 0.0
      %233 = vmatpush1.msra.mxu0 0.0
      %234 = vmatprep.subr.mxu0 0.0
      %235 = vmatpush1.msra.mxu0 0.0
      %236 = vmatprep.subr.mxu0 0.0
      %237 = vmatpush1.msra.mxu0 0.0
      %238 = vmatprep.subr.mxu0 0.0
      %239 = vmatpush1.msra.mxu0 0.0
      %240 = vmatprep.subr.mxu0 0.0
      %241 = vmatpush1.msra.mxu0 0.0
      %242 = vmatprep.subr.mxu0 0.0
      %243 = vmatpush1.msra.mxu0 0.0
      %244 = vmatprep.subr.mxu0 0.0
      %245 = vmatpush1.msra.mxu0 0.0
      %246 = vmatprep.mubr.f32.mxu0 0.0
      %247 = vmatmul.mubr.f32.gmra.mrb[0].mxu0 %v159
      %v248 = vpop.f32.mrb[0].mxu0
      %v249 = vadd.f32 0.0, %v248
      %v250 = vpop.f32.mrb[0].mxu0
      %251 = vmatprep.mubr.f32.mxu0 0.0
      %252 = vmatmul.mubr.f32.gmra.mrb[0].mxu0 %v162
      %v253 = vpop.f32.mrb[0].mxu0
      %v254 = vadd.f32 0.0, %v253
      %v255 = vpop.f32.mrb[0].mxu0
      %256 = vmatprep.mubr.f32.mxu0 0.0
      %257 = vmatmul.mubr.f32.gmra.mrb[0].mxu0 %v165
      %v258 = vpop.f32.mrb[0].mxu0
      %v259 = vadd.f32 0.0, %v258
      %v260 = vpop.f32.mrb[0].mxu0
      %261 = vmatprep.mubr.f32.mxu0 0.0
      %262 = vmatmul.mubr.f32.gmra.mrb[0].mxu0 %v168
      %v263 = vpop.f32.mrb[0].mxu0
      %v264 = vadd.f32 0.0, %v263
      %v265 = vpop.f32.mrb[0].mxu0
      %266 = vmatprep.mubr.f32.mxu0 0.0
      %267 = vmatmul.mubr.f32.gmra.mrb[0].mxu0 %v171
      %v268 = vpop.f32.mrb[0].mxu0
      %v269 = vadd.f32 0.0, %v268
      %v270 = vpop.f32.mrb[0].mxu0
      %271 = vmatprep.mubr.f32.mxu0 0.0
      %272 = vmatmul.mubr.f32.gmra.mrb[0].mxu0 %v174
      %v273 = vpop.f32.mrb[0].mxu0
      %v274 = vadd.f32 0.0, %v273
      %v275 = vpop.f32.mrb[0].mxu0
      %276 = vmatprep.mubr.f32.mxu0 0.0
      %277 = vmatmul.mubr.f32.gmra.mrb[0].mxu0 %v177
      %v278 = vpop.f32.mrb[0].mxu0
      %v279 = vadd.f32 0.0, %v278
      %v280 = vpop.f32.mrb[0].mxu0
      %281 = vmatprep.mubr.f32.mxu0 0.0
      %282 = vmatmul.mubr.f32.gmra.mrb[0].mxu0 %v180
      %v283 = vpop.f32.mrb[0].mxu0
      %v284 = vadd.f32 0.0, %v283
      %v285 = vpop.f32.mrb[0].mxu0
      %286 = vdwg.mxu0
      %vm295 = vcmask 1040384
      %v296 = vrot.slane %v249, 7
      %v297 = vrot.slane %v254, 7
      %v298 = vsel %vm295, %v296, %v297
      %v299 = vrot.slane %v259, 7
      %v300 = vsel %vm295, %v297, %v299
      %v301 = vrot.slane %v264, 7
      %v302 = vsel %vm295, %v299, %v301
      %v303 = vrot.slane %v269, 7
      %v304 = vsel %vm295, %v301, %v303
      %v305 = vrot.slane %v274, 7
      %v306 = vsel %vm295, %v303, %v305
      %v307 = vrot.slane %v279, 7
      %v308 = vsel %vm295, %v305, %v307
      %v309 = vrot.slane %v284, 7
      %v310 = vsel %vm295, %v307, %v309
      %v319 = vsel %vm295, %v249, %v296
      %vm320 = vcmask 1046528
      %v321 = vrot.slane %v249, 1
      %v322 = vrot.slane %v254, 1
      %v323 = vsel %vm320, %v321, %v322
      %v324 = vrot.slane %v259, 1
      %v325 = vsel %vm320, %v322, %v324
      %v326 = vrot.slane %v264, 1
      %v327 = vsel %vm320, %v324, %v326
      %v328 = vrot.slane %v269, 1
      %v329 = vsel %vm320, %v326, %v328
      %v330 = vrot.slane %v274, 1
      %v331 = vsel %vm320, %v328, %v330
      %v332 = vrot.slane %v279, 1
      %v333 = vsel %vm320, %v330, %v332
      %v334 = vrot.slane %v284, 1
      %v335 = vsel %vm320, %v332, %v334
      %v344 = vsel %vm320, %v334, %v284
      %v345 = vlaneseq
      %v346 = vshrl.u32 %v345, 7
      %v347 = vadd.s32 %v346, 8
      %v348 = vadd.s32 %v346, 16
      %v349 = vadd.s32 %v346, 24
      %v350 = vadd.s32 %v346, 32
      %v351 = vadd.s32 %v346, 40
      %v352 = vadd.s32 %v346, 48
      %v353 = vadd.s32 %v346, 56
      %vm354 = vcmp.lt.s32.totalorder %v346, 0
      %v355 = vsub.s32 0, %v346
      %v356 = vsel %vm354, %v355, %v346
      %v357 = vshrl.u32 %v356, 4
      %v358 = vand.u32 %v356, 15
      %v359 = vsub.s32 0, %v358
      %v360 = vsel %vm354, %v359, %v358
      %vm361 = vcmp.lt.s32.totalorder %v347, 0
      %v362 = vsub.s32 0, %v347
      %v363 = vsel %vm361, %v362, %v347
      %v364 = vshrl.u32 %v363, 4
      %v365 = vand.u32 %v363, 15
      %v366 = vsub.s32 0, %v365
      %v367 = vsel %vm361, %v366, %v365
      %vm368 = vcmp.lt.s32.totalorder %v348, 0
      %v369 = vsub.s32 0, %v348
      %v370 = vsel %vm368, %v369, %v348
      %v371 = vshrl.u32 %v370, 4
      %v372 = vand.u32 %v370, 15
      %v373 = vsub.s32 0, %v372
      %v374 = vsel %vm368, %v373, %v372
      %vm375 = vcmp.lt.s32.totalorder %v349, 0
      %v376 = vsub.s32 0, %v349
      %v377 = vsel %vm375, %v376, %v349
      %v378 = vshrl.u32 %v377, 4
      %v379 = vand.u32 %v377, 15
      %v380 = vsub.s32 0, %v379
      %v381 = vsel %vm375, %v380, %v379
      %vm382 = vcmp.lt.s32.totalorder %v350, 0
      %v383 = vsub.s32 0, %v350
      %v384 = vsel %vm382, %v383, %v350
      %v385 = vshrl.u32 %v384, 4
      %v386 = vand.u32 %v384, 15
      %v387 = vsub.s32 0, %v386
      %v388 = vsel %vm382, %v387, %v386
      %vm389 = vcmp.lt.s32.totalorder %v351, 0
      %v390 = vsub.s32 0, %v351
      %v391 = vsel %vm389, %v390, %v351
      %v392 = vshrl.u32 %v391, 4
      %v393 = vand.u32 %v391, 15
      %v394 = vsub.s32 0, %v393
      %v395 = vsel %vm389, %v394, %v393
      %vm396 = vcmp.lt.s32.totalorder %v352, 0
      %v397 = vsub.s32 0, %v352
      %v398 = vsel %vm396, %v397, %v352
      %v399 = vshrl.u32 %v398, 4
      %v400 = vand.u32 %v398, 15
      %v401 = vsub.s32 0, %v400
      %v402 = vsel %vm396, %v401, %v400
      %vm403 = vcmp.lt.s32.totalorder %v353, 0
      %v404 = vsub.s32 0, %v353
      %v405 = vsel %vm403, %v404, %v353
      %v406 = vshrl.u32 %v405, 4
      %v407 = vand.u32 %v405, 15
      %v408 = vsub.s32 0, %v407
      %v409 = vsel %vm403, %v408, %v407
      %vm410 = vcmp.ne.s32.totalorder %v360, 0
      %vm411 = vcmp.ne.s32.totalorder %v367, 0
      %vm412 = vcmp.ne.s32.totalorder %v374, 0
      %vm413 = vcmp.ne.s32.totalorder %v381, 0
      %vm414 = vcmp.ne.s32.totalorder %v388, 0
      %vm415 = vcmp.ne.s32.totalorder %v395, 0
      %vm416 = vcmp.ne.s32.totalorder %v402, 0
      %vm417 = vcmp.ne.s32.totalorder %v409, 0
      %vm418 = vcmp.lt.s32.totalorder %v360, 0
      %vm419 = vcmp.lt.s32.totalorder %v367, 0
      %vm420 = vcmp.lt.s32.totalorder %v374, 0
      %vm421 = vcmp.lt.s32.totalorder %v381, 0
      %vm422 = vcmp.lt.s32.totalorder %v388, 0
      %vm423 = vcmp.lt.s32.totalorder %v395, 0
      %vm424 = vcmp.lt.s32.totalorder %v402, 0
      %vm425 = vcmp.lt.s32.totalorder %v409, 0
      %vm426 = vmand %vm418, %vm410
      %vm427 = vmand %vm419, %vm411
      %vm428 = vmand %vm420, %vm412
      %vm429 = vmand %vm421, %vm413
      %vm430 = vmand %vm422, %vm414
      %vm431 = vmand %vm423, %vm415
      %vm432 = vmand %vm424, %vm416
      %vm433 = vmand %vm425, %vm417
      %v434 = vadd.s32 %v360, 16
      %v435 = vadd.s32 %v367, 16
      %v436 = vadd.s32 %v374, 16
      %v437 = vadd.s32 %v381, 16
      %v438 = vadd.s32 %v388, 16
      %v439 = vadd.s32 %v395, 16
      %v440 = vadd.s32 %v402, 16
      %v441 = vadd.s32 %v409, 16
      %v442 = vsel %vm426, %v434, %v360
      %v443 = vsel %vm427, %v435, %v367
      %v444 = vsel %vm428, %v436, %v374
      %v445 = vsel %vm429, %v437, %v381
      %v446 = vsel %vm430, %v438, %v388
      %v447 = vsel %vm431, %v439, %v395
      %v448 = vsel %vm432, %v440, %v402
      %v449 = vsel %vm433, %v441, %v409
      %vm450 = vcmp.eq.s32.totalorder %v442, 0
      %vm451 = vcmp.eq.s32.totalorder %v443, 0
      %vm452 = vcmp.eq.s32.totalorder %v444, 0
      %vm453 = vcmp.eq.s32.totalorder %v445, 0
      %vm454 = vcmp.eq.s32.totalorder %v446, 0
      %vm455 = vcmp.eq.s32.totalorder %v447, 0
      %vm456 = vcmp.eq.s32.totalorder %v448, 0
      %vm457 = vcmp.eq.s32.totalorder %v449, 0
      %v458 = vmul.f32 %v249, 0.75
      %v459 = vmul.f32 %v254, 0.75
      %v460 = vmul.f32 %v259, 0.75
      %v461 = vmul.f32 %v264, 0.75
      %v462 = vmul.f32 %v269, 0.75
      %v463 = vmul.f32 %v274, 0.75
      %v464 = vmul.f32 %v279, 0.75
      %v465 = vmul.f32 %v284, 0.75
      %v466 = vmul.f32 %v319, 0.25
      %v467 = vmul.f32 %v298, 0.25
      %v468 = vmul.f32 %v300, 0.25
      %v469 = vmul.f32 %v302, 0.25
      %v470 = vmul.f32 %v304, 0.25
      %v471 = vmul.f32 %v306, 0.25
      %v472 = vmul.f32 %v308, 0.25
      %v473 = vmul.f32 %v310, 0.25
      %v474 = vadd.f32 %v458, %v466
      %v475 = vadd.f32 %v459, %v467
      %v476 = vadd.f32 %v460, %v468
      %v477 = vadd.f32 %v461, %v469
      %v478 = vadd.f32 %v462, %v470
      %v479 = vadd.f32 %v463, %v471
      %v480 = vadd.f32 %v464, %v472
      %v481 = vadd.f32 %v465, %v473
      %v482 = vsel %vm450, 1, 0
      %v483 = vsel %vm451, 1, 0
      %v484 = vsel %vm452, 1, 0
      %v485 = vsel %vm453, 1, 0
      %v486 = vsel %vm454, 1, 0
      %v487 = vsel %vm455, 1, 0
      %v488 = vsel %vm456, 1, 0
      %v489 = vsel %vm457, 1, 0
      %vm490 = vcmp.eq.s32.totalorder %v482, 1
      %vm491 = vcmp.eq.s32.totalorder %v483, 1
      %vm492 = vcmp.eq.s32.totalorder %v484, 1
      %vm493 = vcmp.eq.s32.totalorder %v485, 1
      %vm494 = vcmp.eq.s32.totalorder %v486, 1
      %vm495 = vcmp.eq.s32.totalorder %v487, 1
      %vm496 = vcmp.eq.s32.totalorder %v488, 1
      %vm497 = vcmp.eq.s32.totalorder %v489, 1
      %v498 = vsel %vm490, %v249, %v474
      %v499 = vsel %vm491, %v254, %v475
      %v500 = vsel %vm492, %v259, %v476
      %v501 = vsel %vm493, %v264, %v477
      %v502 = vsel %vm494, %v269, %v478
      %v503 = vsel %vm495, %v274, %v479
      %v504 = vsel %vm496, %v279, %v480
      %v505 = vsel %vm497, %v284, %v481
      %vm506 = vcmp.eq.s32.totalorder %v442, 15
      %vm507 = vcmp.eq.s32.totalorder %v443, 15
      %vm508 = vcmp.eq.s32.totalorder %v444, 15
      %vm509 = vcmp.eq.s32.totalorder %v445, 15
      %vm510 = vcmp.eq.s32.totalorder %v446, 15
      %vm511 = vcmp.eq.s32.totalorder %v447, 15
      %vm512 = vcmp.eq.s32.totalorder %v448, 15
      %vm513 = vcmp.eq.s32.totalorder %v449, 15
      %v514 = vmul.f32 %v323, 0.25
      %v515 = vmul.f32 %v325, 0.25
      %v516 = vmul.f32 %v327, 0.25
      %v517 = vmul.f32 %v329, 0.25
      %v518 = vmul.f32 %v331, 0.25
      %v519 = vmul.f32 %v333, 0.25
      %v520 = vmul.f32 %v335, 0.25
      %v521 = vmul.f32 %v344, 0.25
      %v522 = vadd.f32 %v458, %v514
      %v523 = vadd.f32 %v459, %v515
      %v524 = vadd.f32 %v460, %v516
      %v525 = vadd.f32 %v461, %v517
      %v526 = vadd.f32 %v462, %v518
      %v527 = vadd.f32 %v463, %v519
      %v528 = vadd.f32 %v464, %v520
      %v529 = vadd.f32 %v465, %v521
      %v530 = vsel %vm506, 1, 0
      %v531 = vsel %vm507, 1, 0
      %v532 = vsel %vm508, 1, 0
      %v533 = vsel %vm509, 1, 0
      %v534 = vsel %vm510, 1, 0
      %v535 = vsel %vm511, 1, 0
      %v536 = vsel %vm512, 1, 0
      %v537 = vsel %vm513, 1, 0
      %vm538 = vcmp.eq.s32.totalorder %v530, 1
      %vm539 = vcmp.eq.s32.totalorder %v531, 1
      %vm540 = vcmp.eq.s32.totalorder %v532, 1
      %vm541 = vcmp.eq.s32.totalorder %v533, 1
      %vm542 = vcmp.eq.s32.totalorder %v534, 1
      %vm543 = vcmp.eq.s32.totalorder %v535, 1
      %vm544 = vcmp.eq.s32.totalorder %v536, 1
      %vm545 = vcmp.eq.s32.totalorder %v537, 1
      %v546 = vsel %vm538, %v249, %v522
      %v547 = vsel %vm539, %v254, %v523
      %v548 = vsel %vm540, %v259, %v524
      %v549 = vsel %vm541, %v264, %v525
      %v550 = vsel %vm542, %v269, %v526
      %v551 = vsel %vm543, %v274, %v527
      %v552 = vsel %vm544, %v279, %v528
      %v553 = vsel %vm545, %v284, %v529
      %562 = vrot.lane.b32.xlu0 %v546, 32
      %v563 = vpop.permute.xlu0 %562
      %564 = vrot.lane.b32.xlu0 %v547, 32
      %v565 = vpop.permute.xlu0 %564
      %566 = vrot.lane.b32.xlu0 %v548, 32
      %v567 = vpop.permute.xlu0 %566
      %568 = vrot.lane.b32.xlu0 %v549, 32
      %v569 = vpop.permute.xlu0 %568
      %570 = vrot.lane.b32.xlu0 %v550, 32
      %v571 = vpop.permute.xlu0 %570
      %572 = vrot.lane.b32.xlu0 %v551, 32
      %v573 = vpop.permute.xlu0 %572
      %574 = vrot.lane.b32.xlu0 %v552, 32
      %v575 = vpop.permute.xlu0 %574
      %576 = vrot.lane.b32.xlu0 %v553, 32
      %v577 = vpop.permute.xlu0 %576
      %vm586 = vcmask 261120
      %v587 = vsel %vm586, %v498, %v563
      %v588 = vsel %vm586, %v499, %v565
      %v589 = vsel %vm586, %v500, %v567
      %v590 = vsel %vm586, %v501, %v569
      %v591 = vsel %vm586, %v502, %v571
      %v592 = vsel %vm586, %v503, %v573
      %v593 = vsel %vm586, %v504, %v575
      %v594 = vsel %vm586, %v505, %v577
      %vm595 = vcmask 523264
      %596 = vst.msk [vmem:[%s145] sm:$0xff] %vm595, %v587
      %597 = vst.msk [vmem:[%s145 + $0x8] sm:$0xff] %vm595, %v588
      %598 = vst.msk [vmem:[%s145 + $0x10] sm:$0xff] %vm595, %v589
      %599 = vst.msk [vmem:[%s145 + $0x18] sm:$0xff] %vm595, %v590
      %600 = vst.msk [vmem:[%s145 + $0x20] sm:$0xff] %vm595, %v591
      %601 = vst.msk [vmem:[%s145 + $0x28] sm:$0xff] %vm595, %v592
      %602 = vst.msk [vmem:[%s145 + $0x30] sm:$0xff] %vm595, %v593
      %603 = vst.msk [vmem:[%s145 + $0x38] sm:$0xff] %vm595, %v594
      %s604 = smul.u32 8, %s13
      %p605 = scmp.lt.s32.totalorder %s604, 15
      %s606 = scalar_select %p605, %s604, 15
      %s607 = smul.addr %s606, 8
      %s608 = scalar_lea.vmem %s2, %s607
      // Predicated region
      $region29: #{tpu_custom_call.1} parent=27 // pred_check
        %p609 = pneg %p78
      $region30: #{tpu_custom_call.1} parent=27 // pred_check_branch
        %611 = sbr.rel (%p609) target = $region32
      $region31: #{tpu_custom_call.1} parent=27 // pred_region
        %s612 = smul.u32 8, %s13
      $region32: #{tpu_custom_call.1} parent=27 // pred_fallthru
        _
    $region28: #{tpu_custom_call.1} parent=5 // pred_fallthru
      _
    %p613 = scmp.le.s32.totalorder 2, %s8
    // Predicated region
    $region33: #{tpu_custom_call.1} parent=5 // pred_check
      %p614 = pneg %p613
    $region34: #{tpu_custom_call.1} parent=5 // pred_check_branch
      %616 = sbr.rel (%p614) target = $region36
    $region35: #{tpu_custom_call.1} parent=5 // pred_region
      %s617 = ssub.s32 %s8, 2
      // Predicated region
      $region37: #{tpu_custom_call.1} parent=35 // pred_check
        %p618 = pneg %p84
      $region38: #{tpu_custom_call.1} parent=35 // pred_check_branch
        %620 = sbr.rel (%p618) target = $region40
      $region39: #{tpu_custom_call.1} parent=35 // pred_region
        %s621 = smul.u32 8, %s14
        %p622 = scmp.lt.s32.totalorder %s621, 15
        %s623 = scalar_select %p622, %s621, 15
        %s624 = smul.addr %s623, 8
        %s625 = scalar_lea.vmem %s2, %s624
      $region40: #{tpu_custom_call.1} parent=35 // pred_fallthru
        _
    $region36: #{tpu_custom_call.1} parent=5 // pred_fallthru
      _
  $region6: #{tpu_custom_call.1} parent=0 // loop_footer
    %s12 = sadd.s32 1, %s8
  $region7: #{tpu_custom_call.1} parent=0 // loop_footer_branch
    %7 = sbr.rel target = $region3
  $region8: #{tpu_custom_call.1} parent=0 // loop_exit
    _

</llo_original>
